<compile_context>
chip_gen: v5e
topology: v5e:2x2
jax: 0.10.0
libtpu: 0.0.40
codegen_flags: <defaults>
</compile_context>

<pallas_src>
import jax
import jax.numpy as jnp
from jax.experimental import pallas as pl
from jax.experimental.pallas import tpu as pltpu


def _round_up(x, m):
    return ((x + m - 1) // m) * m


def _ffn_kernel(x_ref, wgu_ref, wd_ref, o_ref, acc_ref):
    # x_ref: (tm, H)   wgu_ref: (H, 2*ti)  [gate_k | up_k]
    # wd_ref: (ti, H)  o_ref: (tm, H)      acc_ref: (tm, H) f32 scratch
    k = pl.program_id(1)

    @pl.when(k == 0)
    def _():
        acc_ref[...] = jnp.zeros_like(acc_ref)

    x = x_ref[...]
    # Fused gate|up projection: one MXU push of width 2*ti, f32 accumulation.
    gu = jnp.dot(x, wgu_ref[...], preferred_element_type=jnp.float32)
    ti = wgu_ref.shape[1] // 2
    gate = gu[:, :ti]
    up = gu[:, ti:]
    hidden = (gate * jax.nn.sigmoid(gate)) * up          # SiLU(gate) * up, f32

    # Partial down-projection for this intermediate tile, accumulated in f32.
    acc_ref[...] += jnp.dot(hidden.astype(wd_ref.dtype), wd_ref[...],
                            preferred_element_type=jnp.float32)

    @pl.when(k == pl.num_programs(1) - 1)
    def _():
        o_ref[...] = acc_ref[...].astype(o_ref.dtype)


def feed_forward(x, w_gate, w_up, w_down, *, tm=256, ti_target=512,
                 compute_dtype=jnp.bfloat16):
    """SwiGLU FFN: down_proj( silu(x @ w_gate) * (x @ w_up) ).

    x: [B, S, H]; w_gate/w_up: [H, I]; w_down: [I, H]  ->  [B, S, H]
    Weights are stored pre-transposed ([in, out]) vs. PyTorch nn.Linear.
    """
    B, S, H = x.shape
    I = w_gate.shape[1]
    T = B * S
    out_dtype = x.dtype
    compute_dtype = jnp.dtype(compute_dtype)

    # ---- tile selection ----------------------------------------------------
    # Sublane pack for the second-minor dim of the token tile.
    pack = 16 if compute_dtype == jnp.dtype(jnp.bfloat16) else 8
    tm = _round_up(max(tm, pack), pack)
    tm_eff = min(tm, _round_up(T, pack))        # clamp for tiny token counts
    T_pad = _round_up(T, tm_eff)

    # Intermediate tile: lane-dense (multiple of 128), capped at ti_target.
    ti = min(_round_up(max(ti_target, 128), 128), _round_up(I, 128))
    I_pad = _round_up(I, ti)
    nk = I_pad // ti
    nt = T_pad // tm_eff

    # ---- operand prep: pad, fuse gate/up, cast to compute dtype -------------
    x2d = x.reshape(T, H).astype(compute_dtype)
    if T_pad != T:
        x2d = jnp.pad(x2d, ((0, T_pad - T), (0, 0)))

    wg = w_gate.astype(compute_dtype)
    wu = w_up.astype(compute_dtype)
    wd = w_down.astype(compute_dtype)
    if I_pad != I:
        wg = jnp.pad(wg, ((0, 0), (0, I_pad - I)))
        wu = jnp.pad(wu, ((0, 0), (0, I_pad - I)))
        wd = jnp.pad(wd, ((0, I_pad - I), (0, 0)))
    # Rearrange so each k-tile of the fused weight is [gate_k | up_k].
    w_gu = jnp.concatenate(
        [wg.reshape(H, nk, ti), wu.reshape(H, nk, ti)], axis=-1
    ).reshape(H, nk * 2 * ti)

    # ---- VMEM budget / cost hint --------------------------------------------
    cbytes = compute_dtype.itemsize
    obytes = jnp.dtype(out_dtype).itemsize
    vmem_est = (2 * (tm_eff * H + H * 2 * ti + ti * H) * cbytes   # dbl-buffered inputs
                + tm_eff * H * 4                                  # f32 accumulator
                + 2 * tm_eff * H * obytes)                        # output dbl-buffer
    vmem_limit = max(32 * 1024 * 1024,
                     min(int(vmem_est * 1.5), 96 * 1024 * 1024))

    cost = pl.CostEstimate(
        flops=6 * T_pad * H * I_pad,
        transcendentals=T_pad * I_pad,
        bytes_accessed=(x2d.size * cbytes + w_gu.size * cbytes
                        + wd.size * cbytes + T_pad * H * obytes),
    )

    out2d = pl.pallas_call(
        _ffn_kernel,
        out_shape=jax.ShapeDtypeStruct((T_pad, H), out_dtype),
        grid_spec=pltpu.PrefetchScalarGridSpec(
            num_scalar_prefetch=0,
            grid=(nt, nk),                                       # tokens x I-tiles
            in_specs=[
                pl.BlockSpec((tm_eff, H), lambda i, k: (i, 0)),  # x tile (resident over k)
                pl.BlockSpec((H, 2 * ti), lambda i, k: (0, k)),  # fused [gate_k | up_k]
                pl.BlockSpec((ti, H), lambda i, k: (k, 0)),      # down_proj tile
            ],
            out_specs=pl.BlockSpec((tm_eff, H), lambda i, k: (i, 0)),
            scratch_shapes=[pltpu.VMEM((tm_eff, H), jnp.float32)],
        ),
        compiler_params=pltpu.CompilerParams(
            dimension_semantics=("parallel", "arbitrary"),
            vmem_limit_bytes=vmem_limit),
        cost_estimate=cost,
    )(x2d, w_gu, wd)

    return out2d[:T].reshape(B, S, H)


def _reference(x, w_gate, w_up, w_down):
    g = x @ w_gate
    u = x @ w_up
    return (jax.nn.silu(g) * u) @ w_down


if __name__ == "__main__":
    # Small config: hidden_size=128 -> intermediate_size = 64*ceil((128*8/3)/64) = 384
    B, S, H = 2, 8, 128
    I = 64 * ((int(H * 8 / 3) + 63) // 64)  # 384

    key = jax.random.PRNGKey(0)
    kx, kg, ku, kd = jax.random.split(key, 4)

    x = jax.random.normal(kx, (B, S, H), dtype=jnp.float32)
    # Deterministic "Linear" weights (no bias), stored transposed: [in, out]
    w_gate = jax.random.normal(kg, (H, I), dtype=jnp.float32) * 0.02
    w_up = jax.random.normal(ku, (H, I), dtype=jnp.float32) * 0.02
    w_down = jax.random.normal(kd, (I, H), dtype=jnp.float32) * 0.02

    # --- f32 path: matches the PyTorch module numerics ---
    out_f32 = feed_forward(x, w_gate, w_up, w_down, compute_dtype=jnp.float32)
    out_f32 = jax.block_until_ready(out_f32)
    ref = _reference(x, w_gate, w_up, w_down)
    assert out_f32.shape == (B, S, H)
    assert jnp.allclose(out_f32, ref, atol=2e-4, rtol=2e-3), "f32 mismatch vs reference"

    # --- bf16 MXU path (f32 accumulation), the production-fast configuration ---
    out_bf16 = feed_forward(x, w_gate, w_up, w_down, compute_dtype=jnp.bfloat16)
    out_bf16 = jax.block_until_ready(out_bf16)
    ref_bf16 = _reference(x.astype(jnp.bfloat16).astype(jnp.float32),
                          w_gate.astype(jnp.bfloat16).astype(jnp.float32),
                          w_up.astype(jnp.bfloat16).astype(jnp.float32),
                          w_down.astype(jnp.bfloat16).astype(jnp.float32))
    assert out_bf16.shape == (B, S, H)
    assert jnp.allclose(out_bf16.astype(jnp.float32), ref_bf16,
                        atol=2e-3, rtol=3e-2), "bf16 mismatch vs reference"

    print("KERNEL_OK")
</pallas_src>

<mosaic_0001>
module attributes {stable_mosaic.version = 11 : i64} {
  func.func @_ffn_kernel(%arg0: i32, %arg1: i32, %arg2: memref<16x128xf32, #tpu.memory_space<vmem>>, %arg3: memref<128x768xf32, #tpu.memory_space<vmem>>, %arg4: memref<384x128xf32, #tpu.memory_space<vmem>>, %arg5: memref<16x128xf32, #tpu.memory_space<vmem>>, %arg6: memref<16x128xf32, #tpu.memory_space<vmem>>) attributes {dimension_semantics = [#tpu.dimension_semantics<parallel>, #tpu.dimension_semantics<arbitrary>], iteration_bounds = array<i64: 1, 1>, scalar_prefetch = 0 : i64, scratch_operands = 1 : i64, tpu.core_type = #tpu.core_type<tc>, window_params = [{transform_indices = @transform_0, window_bounds = array<i64: 16, 128>}, {transform_indices = @transform_1, window_bounds = array<i64: 128, 768>}, {transform_indices = @transform_2, window_bounds = array<i64: 384, 128>}, {transform_indices = @transform_3, window_bounds = array<i64: 16, 128>}]} {
    %c0_i32 = arith.constant 0 : i32
    %0 = arith.cmpi eq, %arg1, %c0_i32 : i32
    %1 = arith.extui %0 : i1 to i32
    %c0_i32_0 = arith.constant 0 : i32
    %2 = arith.cmpi ne, %1, %c0_i32_0 : i32
    scf.if %2 {
      %cst_14 = arith.constant 0.000000e+00 : f32
      %23 = vector.broadcast %cst_14 : f32 to vector<16x128xf32>
      %c0_15 = arith.constant 0 : index
      %c0_16 = arith.constant 0 : index
      %24 = vector.load %arg6[%c0_15, %c0_16] : memref<16x128xf32, #tpu.memory_space<vmem>>, vector<16x128xf32>
      tpu.vector_store %arg6[%c0_15, %c0_16], %23 {strides = array<i32>} : memref<16x128xf32, #tpu.memory_space<vmem>>, vector<16x128xf32>,
    } else {
    }
    %c0 = arith.constant 0 : index
    %c0_1 = arith.constant 0 : index
    %3 = vector.load %arg2[%c0, %c0_1] : memref<16x128xf32, #tpu.memory_space<vmem>>, vector<16x128xf32>
    %c0_2 = arith.constant 0 : index
    %c0_3 = arith.constant 0 : index
    %4 = vector.load %arg3[%c0_2, %c0_3] : memref<128x768xf32, #tpu.memory_space<vmem>>, vector<128x768xf32>
    %cst = arith.constant dense<0.000000e+00> : vector<16x768xf32>
    %5 = tpu.matmul %3, %4, %cst {dimension_numbers = #tpu.dot_dimension_numbers<[1], [0], [0], [1], [0, 0, 1, 1], [], []>} : vector<16x128xf32>, vector<128x768xf32>, vector<16x768xf32> -> vector<16x768xf32>
    %6 = vector.extract_strided_slice %5 {offsets = [0, 0], sizes = [16, 384], strides = [1, 1]} : vector<16x768xf32> to vector<16x384xf32>
    %7 = vector.extract_strided_slice %5 {offsets = [0, 384], sizes = [16, 384], strides = [1, 1]} : vector<16x768xf32> to vector<16x384xf32>
    %8 = arith.negf %6 : vector<16x384xf32>
    %9 = math.exp %8 : vector<16x384xf32>
    %cst_4 = arith.constant 1.000000e+00 : f32
    %10 = vector.broadcast %cst_4 : f32 to vector<16x384xf32>
    %11 = arith.addf %10, %9 : vector<16x384xf32>
    %12 = arith.divf %10, %11 : vector<16x384xf32>
    %13 = arith.mulf %6, %12 : vector<16x384xf32>
    %14 = arith.mulf %13, %7 : vector<16x384xf32>
    %c0_5 = arith.constant 0 : index
    %c0_6 = arith.constant 0 : index
    %15 = vector.load %arg6[%c0_5, %c0_6] : memref<16x128xf32, #tpu.memory_space<vmem>>, vector<16x128xf32>
    %c0_7 = arith.constant 0 : index
    %c0_8 = arith.constant 0 : index
    %16 = vector.load %arg4[%c0_7, %c0_8] : memref<384x128xf32, #tpu.memory_space<vmem>>, vector<384x128xf32>
    %cst_9 = arith.constant dense<0.000000e+00> : vector<16x128xf32>
    %17 = tpu.matmul %14, %16, %cst_9 {dimension_numbers = #tpu.dot_dimension_numbers<[1], [0], [0], [1], [0, 0, 1, 1], [], []>} : vector<16x384xf32>, vector<384x128xf32>, vector<16x128xf32> -> vector<16x128xf32>
    %18 = arith.addf %15, %17 : vector<16x128xf32>
    %c0_10 = arith.constant 0 : index
    %c0_11 = arith.constant 0 : index
    %19 = vector.load %arg6[%c0_10, %c0_11] : memref<16x128xf32, #tpu.memory_space<vmem>>, vector<16x128xf32>
    tpu.vector_store %arg6[%c0_10, %c0_11], %18 {strides = array<i32>} : memref<16x128xf32, #tpu.memory_space<vmem>>, vector<16x128xf32>,
    %c0_i32_12 = arith.constant 0 : i32
    %20 = arith.cmpi eq, %arg1, %c0_i32_12 : i32
    %21 = arith.extui %20 : i1 to i32
    %c0_i32_13 = arith.constant 0 : i32
    %22 = arith.cmpi ne, %21, %c0_i32_13 : i32
    scf.if %22 {
      %c0_14 = arith.constant 0 : index
      %c0_15 = arith.constant 0 : index
      %23 = vector.load %arg6[%c0_14, %c0_15] : memref<16x128xf32, #tpu.memory_space<vmem>>, vector<16x128xf32>
      %c0_16 = arith.constant 0 : index
      %c0_17 = arith.constant 0 : index
      %24 = vector.load %arg5[%c0_16, %c0_17] : memref<16x128xf32, #tpu.memory_space<vmem>>, vector<16x128xf32>
      tpu.vector_store %arg5[%c0_16, %c0_17], %23 {strides = array<i32>} : memref<16x128xf32, #tpu.memory_space<vmem>>, vector<16x128xf32>,
    } else {
    }
    return
  }
  func.func @transform_0(%arg0: i32, %arg1: i32) -> (i32, i32) {
    %c0_i32 = arith.constant 0 : i32
    %c0_i32_0 = arith.constant 0 : i32
    return %arg0, %c0_i32 : i32, i32
  }
  func.func @transform_1(%arg0: i32, %arg1: i32) -> (i32, i32) {
    %c0_i32 = arith.constant 0 : i32
    %c0_i32_0 = arith.constant 0 : i32
    return %c0_i32, %arg1 : i32, i32
  }
  func.func @transform_2(%arg0: i32, %arg1: i32) -> (i32, i32) {
    %c0_i32 = arith.constant 0 : i32
    %c0_i32_0 = arith.constant 0 : i32
    return %arg1, %c0_i32 : i32, i32
  }
  func.func @transform_3(%arg0: i32, %arg1: i32) -> (i32, i32) {
    %c0_i32 = arith.constant 0 : i32
    %c0_i32_0 = arith.constant 0 : i32
    return %arg0, %c0_i32 : i32, i32
  }
}

</mosaic_0001>

<llo_original>
// kernel: tpu_custom_call.1
$region0: #{tpu_custom_call.1}
  #allocation0 [shape = 'u32[]', space=smem, size = 0x4, offset = 0x4, fixed_abs, tag = 'smem constant byte address 0x4 - core index']
  #allocation1 [shape = 'u32[72,128]{1,0:T(1,128)}', space=vmem, size = 0x9000, scoped, tag = 'internal scratch']
  #allocation2 [shape = 'f32[16,128]{1,0:T(8,128)}', space=vmem, size = 0x2000, scoped, tag = 'scratch operand']
  %s0 = inlined_call_operand.hbm [shape: f32[16,128], index: 0, kind: input, shape index: {}]
  %s1 = inlined_call_operand.hbm [shape: f32[128,768], index: 1, kind: input, shape index: {}]
  %s2 = inlined_call_operand.hbm [shape: f32[384,128], index: 2, kind: input, shape index: {}]
  %s3 = inlined_call_operand.hbm [shape: f32[16,128], index: 3, kind: output, shape index: {}]
  %s4 = sld [smem:[#allocation0]]
  $region42: #{tpu_custom_call.1} parent=0
    _
  %s6 = ssub.s32 1, %s4
  %s7 = scalar_select 0, %s6, %s4
  $region1: #{tpu_custom_call.1} parent=0
    #allocation3 [shape = 'u8[8192]{0}', space=vmem, size = 0x2000, scoped, tag = 'input window, operand 0, single buffered']
    #allocation4 [shape = 's32[1]{0}', space=sflag, size = 0x4, scoped, tag = 'scoped memory for tpu_custom_call.1']
    #allocation5 [shape = 's32[1]{0}', space=sflag, size = 0x4, scoped, tag = 'scoped memory for tpu_custom_call.1']
    #allocation6 [shape = 'u8[393216]{0}', space=vmem, size = 0x60000, scoped, tag = 'input window, operand 1, single buffered']
    #allocation7 [shape = 's32[1]{0}', space=sflag, size = 0x4, scoped, tag = 'scoped memory for tpu_custom_call.1']
    #allocation8 [shape = 'u8[196608]{0}', space=vmem, size = 0x30000, scoped, tag = 'input window, operand 2, single buffered']
    #allocation9 [shape = 'u8[8192]{0}', space=vmem, size = 0x2000, scoped, tag = 'output window, operand 0, single buffered']
    %8 = vsyncpa [#allocation4], 0
    %9 = vsyncpa [#allocation7], 0
    %10 = vsyncpa [#allocation5], 0
    // Predicated region
    $region2: #{tpu_custom_call.1} parent=1 // pred_check
      _
    $region3: #{tpu_custom_call.1} parent=1 // pred_check_branch
      %12 = sbr.rel (0) target = $region5
    $region4: #{tpu_custom_call.1} parent=1 // pred_region
      %14 = vsyncadd [#allocation4], 0
      %s15 = sshll.u32 %s0, 4
      %s16 = int_to_ptr.hbm [resolvable:$true] %s15
      %s17 = sshll.u32 [#allocation3], 4
      %s18 = int_to_ptr.vmem [resolvable:$true] %s17
      %23 = dma.hbm_to_vmem [thread:$0]  %s16, 256, %s18, [#allocation4], 128, 128, 8
    $region5: #{tpu_custom_call.1} parent=1 // pred_fallthru
      _
    // Predicated region
    $region6: #{tpu_custom_call.1} parent=1 // pred_check
      _
    $region7: #{tpu_custom_call.1} parent=1 // pred_check_branch
      %25 = sbr.rel (0) target = $region9
    $region8: #{tpu_custom_call.1} parent=1 // pred_region
      %27 = vsyncadd [#allocation7], 0
      %s28 = sshll.u32 %s1, 4
      %s29 = int_to_ptr.hbm [resolvable:$true] %s28
      %s30 = sshll.u32 [#allocation6], 4
      %s31 = int_to_ptr.vmem [resolvable:$true] %s30
      %36 = dma.hbm_to_vmem [thread:$0]  %s29, 12288, %s31, [#allocation7], 768, 768, 48
    $region9: #{tpu_custom_call.1} parent=1 // pred_fallthru
      _
    // Predicated region
    $region10: #{tpu_custom_call.1} parent=1 // pred_check
      _
    $region11: #{tpu_custom_call.1} parent=1 // pred_check_branch
      %38 = sbr.rel (0) target = $region13
    $region12: #{tpu_custom_call.1} parent=1 // pred_region
      %40 = vsyncadd [#allocation7], 0
      %s41 = sshll.u32 %s2, 4
      %s42 = int_to_ptr.hbm [resolvable:$true] %s41
      %s43 = sshll.u32 [#allocation8], 4
      %s44 = int_to_ptr.vmem [resolvable:$true] %s43
      %49 = dma.hbm_to_vmem [thread:$0]  %s42, 6144, %s44, [#allocation7], 128, 128, 8
    $region13: #{tpu_custom_call.1} parent=1 // pred_fallthru
      _
    // Predicated region
    $region14: #{tpu_custom_call.1} parent=1 // pred_check
      _
    $region15: #{tpu_custom_call.1} parent=1 // pred_check_branch
      %51 = sbr.rel (0) target = $region17
    $region16: #{tpu_custom_call.1} parent=1 // pred_region
      %53 = dma.done [#allocation4], 256
    $region17: #{tpu_custom_call.1} parent=1 // pred_fallthru
      _
    // Predicated region
    $region18: #{tpu_custom_call.1} parent=1 // pred_check
      _
    $region19: #{tpu_custom_call.1} parent=1 // pred_check_branch
      %55 = sbr.rel (0) target = $region21
    $region20: #{tpu_custom_call.1} parent=1 // pred_region
      %57 = dma.done [#allocation7], 12288
    $region21: #{tpu_custom_call.1} parent=1 // pred_fallthru
      _
    // Predicated region
    $region22: #{tpu_custom_call.1} parent=1 // pred_check
      _
    $region23: #{tpu_custom_call.1} parent=1 // pred_check_branch
      %59 = sbr.rel (0) target = $region25
    $region24: #{tpu_custom_call.1} parent=1 // pred_region
      %61 = dma.done [#allocation7], 6144
    $region25: #{tpu_custom_call.1} parent=1 // pred_fallthru
      _
    %p62 = scmp.eq.s32.totalorder 0, 0
    // Predicated region
    $region26: #{tpu_custom_call.1} parent=1 // pred_check
      %p63 = pneg %p62
    $region27: #{tpu_custom_call.1} parent=1 // pred_check_branch
      %65 = sbr.rel (%p63) target = $region29
    $region28: #{tpu_custom_call.1} parent=1 // pred_region
      %66 = vst [vmem:[#allocation2] sm:$0xff] 0.0
      %67 = vst [vmem:[#allocation2 + $0x8] sm:$0xff] 0.0
    $region29: #{tpu_custom_call.1} parent=1 // pred_fallthru
      _
    %v68 = vld [vmem:[#allocation3] sm:$0xff]
    %v69 = vld [vmem:[#allocation3 + $0x8] sm:$0xff]
    %v70 = vld [vmem:[#allocation6] sm:$0xff]
    %v71 = vld [vmem:[#allocation6 + $0x8] sm:$0xff]
    %v72 = vld [vmem:[#allocation6 + $0x10] sm:$0xff]
    %v73 = vld [vmem:[#allocation6 + $0x18] sm:$0xff]
    %v74 = vld [vmem:[#allocation6 + $0x20] sm:$0xff]
    %v75 = vld [vmem:[#allocation6 + $0x28] sm:$0xff]
    %v76 = vld [vmem:[#allocation6 + $0x30] sm:$0xff]
    %v77 = vld [vmem:[#allocation6 + $0x38] sm:$0xff]
    %v78 = vld [vmem:[#allocation6 + $0x40] sm:$0xff]
    %v79 = vld [vmem:[#allocation6 + $0x48] sm:$0xff]
    %v80 = vld [vmem:[#allocation6 + $0x50] sm:$0xff]
    %v81 = vld [vmem:[#allocation6 + $0x58] sm:$0xff]
    %v82 = vld [vmem:[#allocation6 + $0x60] sm:$0xff]
    %v83 = vld [vmem:[#allocation6 + $0x68] sm:$0xff]
    %v84 = vld [vmem:[#allocation6 + $0x70] sm:$0xff]
    %v85 = vld [vmem:[#allocation6 + $0x78] sm:$0xff]
    %v86 = vld [vmem:[#allocation6 + $0x80] sm:$0xff]
    %v87 = vld [vmem:[#allocation6 + $0x88] sm:$0xff]
    %v88 = vld [vmem:[#allocation6 + $0x90] sm:$0xff]
    %v89 = vld [vmem:[#allocation6 + $0x98] sm:$0xff]
    %v90 = vld [vmem:[#allocation6 + $0xa0] sm:$0xff]
    %v91 = vld [vmem:[#allocation6 + $0xa8] sm:$0xff]
    %v92 = vld [vmem:[#allocation6 + $0xb0] sm:$0xff]
    %v93 = vld [vmem:[#allocation6 + $0xb8] sm:$0xff]
    %v94 = vld [vmem:[#allocation6 + $0xc0] sm:$0xff]
    %v95 = vld [vmem:[#allocation6 + $0xc8] sm:$0xff]
    %v96 = vld [vmem:[#allocation6 + $0xd0] sm:$0xff]
    %v97 = vld [vmem:[#allocation6 + $0xd8] sm:$0xff]
    %v98 = vld [vmem:[#allocation6 + $0xe0] sm:$0xff]
    %v99 = vld [vmem:[#allocation6 + $0xe8] sm:$0xff]
    %v100 = vld [vmem:[#allocation6 + $0xf0] sm:$0xff]
    %v101 = vld [vmem:[#allocation6 + $0xf8] sm:$0xff]
    %v102 = vld [vmem:[#allocation6 + $0x100] sm:$0xff]
    %v103 = vld [vmem:[#allocation6 + $0x108] sm:$0xff]
    %v104 = vld [vmem:[#allocation6 + $0x110] sm:$0xff]
    %v105 = vld [vmem:[#allocation6 + $0x118] sm:$0xff]
    %v106 = vld [vmem:[#allocation6 + $0x120] sm:$0xff]
    %v107 = vld [vmem:[#allocation6 + $0x128] sm:$0xff]
    %v108 = vld [vmem:[#allocation6 + $0x130] sm:$0xff]
    %v109 = vld [vmem:[#allocation6 + $0x138] sm:$0xff]
    %v110 = vld [vmem:[#allocation6 + $0x140] sm:$0xff]
    %v111 = vld [vmem:[#allocation6 + $0x148] sm:$0xff]
    %v112 = vld [vmem:[#allocation6 + $0x150] sm:$0xff]
    %v113 = vld [vmem:[#allocation6 + $0x158] sm:$0xff]
    %v114 = vld [vmem:[#allocation6 + $0x160] sm:$0xff]
    %v115 = vld [vmem:[#allocation6 + $0x168] sm:$0xff]
    %v116 = vld [vmem:[#allocation6 + $0x170] sm:$0xff]
    %v117 = vld [vmem:[#allocation6 + $0x178] sm:$0xff]
    %v118 = vld [vmem:[#allocation6 + $0x180] sm:$0xff]
    %v119 = vld [vmem:[#allocation6 + $0x188] sm:$0xff]
    %v120 = vld [vmem:[#allocation6 + $0x190] sm:$0xff]
    %v121 = vld [vmem:[#allocation6 + $0x198] sm:$0xff]
    %v122 = vld [vmem:[#allocation6 + $0x1a0] sm:$0xff]
    %v123 = vld [vmem:[#allocation6 + $0x1a8] sm:$0xff]
    %v124 = vld [vmem:[#allocation6 + $0x1b0] sm:$0xff]
    %v125 = vld [vmem:[#allocation6 + $0x1b8] sm:$0xff]
    %v126 = vld [vmem:[#allocation6 + $0x1c0] sm:$0xff]
    %v127 = vld [vmem:[#allocation6 + $0x1c8] sm:$0xff]
    %v128 = vld [vmem:[#allocation6 + $0x1d0] sm:$0xff]
    %v129 = vld [vmem:[#allocation6 + $0x1d8] sm:$0xff]
    %v130 = vld [vmem:[#allocation6 + $0x1e0] sm:$0xff]
    %v131 = vld [vmem:[#allocation6 + $0x1e8] sm:$0xff]
    %v132 = vld [vmem:[#allocation6 + $0x1f0] sm:$0xff]
    %v133 = vld [vmem:[#allocation6 + $0x1f8] sm:$0xff]
    %v134 = vld [vmem:[#allocation6 + $0x200] sm:$0xff]
    %v135 = vld [vmem:[#allocation6 + $0x208] sm:$0xff]
    %v136 = vld [vmem:[#allocation6 + $0x210] sm:$0xff]
    %v137 = vld [vmem:[#allocation6 + $0x218] sm:$0xff]
    %v138 = vld [vmem:[#allocation6 + $0x220] sm:$0xff]
    %v139 = vld [vmem:[#allocation6 + $0x228] sm:$0xff]
    %v140 = vld [vmem:[#allocation6 + $0x230] sm:$0xff]
    %v141 = vld [vmem:[#allocation6 + $0x238] sm:$0xff]
    %v142 = vld [vmem:[#allocation6 + $0x240] sm:$0xff]
    %v143 = vld [vmem:[#allocation6 + $0x248] sm:$0xff]
    %v144 = vld [vmem:[#allocation6 + $0x250] sm:$0xff]
    %v145 = vld [vmem:[#allocation6 + $0x258] sm:$0xff]
    %v146 = vld [vmem:[#allocation6 + $0x260] sm:$0xff]
    %v147 = vld [vmem:[#allocation6 + $0x268] sm:$0xff]
    %v148 = vld [vmem:[#allocation6 + $0x270] sm:$0xff]
    %v149 = vld [vmem:[#allocation6 + $0x278] sm:$0xff]
    %v150 = vld [vmem:[#allocation6 + $0x280] sm:$0xff]
    %v151 = vld [vmem:[#allocation6 + $0x288] sm:$0xff]
    %v152 = vld [vmem:[#allocation6 + $0x290] sm:$0xff]
    %v153 = vld [vmem:[#allocation6 + $0x298] sm:$0xff]
    %v154 = vld [vmem:[#allocation6 + $0x2a0] sm:$0xff]
    %v155 = vld [vmem:[#allocation6 + $0x2a8] sm:$0xff]
    %v156 = vld [vmem:[#allocation6 + $0x2b0] sm:$0xff]
    %v157 = vld [vmem:[#allocation6 + $0x2b8] sm:$0xff]
    %v158 = vld [vmem:[#allocation6 + $0x2c0] sm:$0xff]
    %v159 = vld [vmem:[#allocation6 + $0x2c8] sm:$0xff]
    %v160 = vld [vmem:[#allocation6 + $0x2d0] sm:$0xff]
    %v161 = vld [vmem:[#allocation6 + $0x2d8] sm:$0xff]
    %v162 = vld [vmem:[#allocation6 + $0x2e0] sm:$0xff]
    %v163 = vld [vmem:[#allocation6 + $0x2e8] sm:$0xff]
    %v164 = vld [vmem:[#allocation6 + $0x2f0] sm:$0xff]
    %v165 = vld [vmem:[#allocation6 + $0x2f8] sm:$0xff]
    %166 = vmatpush.msra.mxu0 %v160
    %167 = vmatpush.msra.mxu0 %v154
    %168 = vmatpush.msra.mxu0 %v148
    %169 = vmatpush.msra.mxu0 %v142
    %170 = vmatpush.msra.mxu0 %v136
    %171 = vmatpush.msra.mxu0 %v130
    %172 = vmatpush.msra.mxu0 %v124
    %173 = vmatpush.msra.mxu0 %v118
    %174 = vmatpush.msra.mxu0 %v112
    %175 = vmatpush.msra.mxu0 %v106
    %176 = vmatpush.msra.mxu0 %v100
    %177 = vmatpush.msra.mxu0 %v94
    %178 = vmatpush.msra.mxu0 %v88
    %179 = vmatpush.msra.mxu0 %v82
    %180 = vmatpush.msra.mxu0 %v76
    %181 = vmatpush.msra.mxu0 %v70
    %182 = vmatmul.f32.gmra.mxu0 %v68
    %v183 = vpop.f32.mrf.mxu0
    %v184 = vadd.f32 0.0, %v183
    %185 = vmatmul.f32.gmra.mxu0 %v69
    %v186 = vpop.f32.mrf.mxu0
    %v187 = vadd.f32 0.0, %v186
    %188 = vdwg.mxu0
    %189 = vmatpush.msra.mxu0 %v161
    %190 = vmatpush.msra.mxu0 %v155
    %191 = vmatpush.msra.mxu0 %v149
    %192 = vmatpush.msra.mxu0 %v143
    %193 = vmatpush.msra.mxu0 %v137
    %194 = vmatpush.msra.mxu0 %v131
    %195 = vmatpush.msra.mxu0 %v125
    %196 = vmatpush.msra.mxu0 %v119
    %197 = vmatpush.msra.mxu0 %v113
    %198 = vmatpush.msra.mxu0 %v107
    %199 = vmatpush.msra.mxu0 %v101
    %200 = vmatpush.msra.mxu0 %v95
    %201 = vmatpush.msra.mxu0 %v89
    %202 = vmatpush.msra.mxu0 %v83
    %203 = vmatpush.msra.mxu0 %v77
    %204 = vmatpush.msra.mxu0 %v71
    %205 = vmatmul.f32.gmra.mxu0 %v68
    %v206 = vpop.f32.mrf.mxu0
    %v207 = vadd.f32 0.0, %v206
    %208 = vmatmul.f32.gmra.mxu0 %v69
    %v209 = vpop.f32.mrf.mxu0
    %v210 = vadd.f32 0.0, %v209
    %211 = vdwg.mxu0
    %212 = vmatpush.msra.mxu0 %v162
    %213 = vmatpush.msra.mxu0 %v156
    %214 = vmatpush.msra.mxu0 %v150
    %215 = vmatpush.msra.mxu0 %v144
    %216 = vmatpush.msra.mxu0 %v138
    %217 = vmatpush.msra.mxu0 %v132
    %218 = vmatpush.msra.mxu0 %v126
    %219 = vmatpush.msra.mxu0 %v120
    %220 = vmatpush.msra.mxu0 %v114
    %221 = vmatpush.msra.mxu0 %v108
    %222 = vmatpush.msra.mxu0 %v102
    %223 = vmatpush.msra.mxu0 %v96
    %224 = vmatpush.msra.mxu0 %v90
    %225 = vmatpush.msra.mxu0 %v84
    %226 = vmatpush.msra.mxu0 %v78
    %227 = vmatpush.msra.mxu0 %v72
    %228 = vmatmul.f32.gmra.mxu0 %v68
    %v229 = vpop.f32.mrf.mxu0
    %v230 = vadd.f32 0.0, %v229
    %231 = vmatmul.f32.gmra.mxu0 %v69
    %v232 = vpop.f32.mrf.mxu0
    %v233 = vadd.f32 0.0, %v232
    %234 = vdwg.mxu0
    %235 = vmatpush.msra.mxu0 %v163
    %236 = vmatpush.msra.mxu0 %v157
    %237 = vmatpush.msra.mxu0 %v151
    %238 = vmatpush.msra.mxu0 %v145
    %239 = vmatpush.msra.mxu0 %v139
    %240 = vmatpush.msra.mxu0 %v133
    %241 = vmatpush.msra.mxu0 %v127
    %242 = vmatpush.msra.mxu0 %v121
    %243 = vmatpush.msra.mxu0 %v115
    %244 = vmatpush.msra.mxu0 %v109
    %245 = vmatpush.msra.mxu0 %v103
    %246 = vmatpush.msra.mxu0 %v97
    %247 = vmatpush.msra.mxu0 %v91
    %248 = vmatpush.msra.mxu0 %v85
    %249 = vmatpush.msra.mxu0 %v79
    %250 = vmatpush.msra.mxu0 %v73
    %251 = vmatmul.f32.gmra.mxu0 %v68
    %v252 = vpop.f32.mrf.mxu0
    %v253 = vadd.f32 0.0, %v252
    %254 = vmatmul.f32.gmra.mxu0 %v69
    %v255 = vpop.f32.mrf.mxu0
    %v256 = vadd.f32 0.0, %v255
    %257 = vdwg.mxu0
    %258 = vmatpush.msra.mxu0 %v164
    %259 = vmatpush.msra.mxu0 %v158
    %260 = vmatpush.msra.mxu0 %v152
    %261 = vmatpush.msra.mxu0 %v146
    %262 = vmatpush.msra.mxu0 %v140
    %263 = vmatpush.msra.mxu0 %v134
    %264 = vmatpush.msra.mxu0 %v128
    %265 = vmatpush.msra.mxu0 %v122
    %266 = vmatpush.msra.mxu0 %v116
    %267 = vmatpush.msra.mxu0 %v110
    %268 = vmatpush.msra.mxu0 %v104
    %269 = vmatpush.msra.mxu0 %v98
    %270 = vmatpush.msra.mxu0 %v92
    %271 = vmatpush.msra.mxu0 %v86
    %272 = vmatpush.msra.mxu0 %v80
    %273 = vmatpush.msra.mxu0 %v74
    %274 = vmatmul.f32.gmra.mxu0 %v68
    %v275 = vpop.f32.mrf.mxu0
    %v276 = vadd.f32 0.0, %v275
    %277 = vmatmul.f32.gmra.mxu0 %v69
    %v278 = vpop.f32.mrf.mxu0
    %v279 = vadd.f32 0.0, %v278
    %280 = vdwg.mxu0
    %281 = vmatpush.msra.mxu0 %v165
    %282 = vmatpush.msra.mxu0 %v159
    %283 = vmatpush.msra.mxu0 %v153
    %284 = vmatpush.msra.mxu0 %v147
    %285 = vmatpush.msra.mxu0 %v141
    %286 = vmatpush.msra.mxu0 %v135
    %287 = vmatpush.msra.mxu0 %v129
    %288 = vmatpush.msra.mxu0 %v123
    %289 = vmatpush.msra.mxu0 %v117
    %290 = vmatpush.msra.mxu0 %v111
    %291 = vmatpush.msra.mxu0 %v105
    %292 = vmatpush.msra.mxu0 %v99
    %293 = vmatpush.msra.mxu0 %v93
    %294 = vmatpush.msra.mxu0 %v87
    %295 = vmatpush.msra.mxu0 %v81
    %296 = vmatpush.msra.mxu0 %v75
    %297 = vmatmul.f32.gmra.mxu0 %v68
    %v298 = vpop.f32.mrf.mxu0
    %v299 = vadd.f32 0.0, %v298
    %300 = vmatmul.f32.gmra.mxu0 %v69
    %v301 = vpop.f32.mrf.mxu0
    %v302 = vadd.f32 0.0, %v301
    %303 = vdwg.mxu0
    %v304 = vxor.u32 %v184, 2147483648
    %v305 = vxor.u32 %v207, 2147483648
    %v306 = vxor.u32 %v230, 2147483648
    %v307 = vxor.u32 %v187, 2147483648
    %v308 = vxor.u32 %v210, 2147483648
    %v309 = vxor.u32 %v233, 2147483648
    %v310 = vmul.f32 %v304, 1.442695
    %v311 = vpow.pop %v310
    %v312 = vmul.f32 %v305, 1.442695
    %v313 = vpow.pop %v312
    %v314 = vmul.f32 %v306, 1.442695
    %v315 = vpow.pop %v314
    %v316 = vmul.f32 %v307, 1.442695
    %v317 = vpow.pop %v316
    %v318 = vmul.f32 %v308, 1.442695
    %v319 = vpow.pop %v318
    %v320 = vmul.f32 %v309, 1.442695
    %v321 = vpow.pop %v320
    %v322 = vadd.f32 %v311, 1.0
    %v323 = vadd.f32 %v313, 1.0
    %v324 = vadd.f32 %v315, 1.0
    %v325 = vadd.f32 %v317, 1.0
    %v326 = vadd.f32 %v319, 1.0
    %v327 = vadd.f32 %v321, 1.0
    %v328 = vrcp.pop %v322
    %v329 = vmul.f32 %v322, %v328
    %v330 = vsub.f32 1.0, %v329
    %v331 = vmul.f32 %v328, %v330
    %v332 = vadd.f32 %v328, %v331
    %vm333 = vweird.f32 %v322
    %vm334 = vweird.f32 %v328
    %vm335 = vmor %vm333, %vm334
    %v336 = vsel %vm335, %v328, %v332
    %v337 = vand.u32 2147483647, %v322
    %vm338 = vcmp.eq.f32.partialorder %v337, 8.507059e+37
    %v339 = vand.u32 %v322, 2147483648
    %v340 = vor.u32 1.1754944e-38, %v339
    %v341 = vsel %vm338, %v340, %v336
    %v342 = vmul.f32 1.0, %v341
    %v343 = vrcp.pop %v323
    %v344 = vmul.f32 %v323, %v343
    %v345 = vsub.f32 1.0, %v344
    %v346 = vmul.f32 %v343, %v345
    %v347 = vadd.f32 %v343, %v346
    %vm348 = vweird.f32 %v323
    %vm349 = vweird.f32 %v343
    %vm350 = vmor %vm348, %vm349
    %v351 = vsel %vm350, %v343, %v347
    %v352 = vand.u32 2147483647, %v323
    %vm353 = vcmp.eq.f32.partialorder %v352, 8.507059e+37
    %v354 = vand.u32 %v323, 2147483648
    %v355 = vor.u32 1.1754944e-38, %v354
    %v356 = vsel %vm353, %v355, %v351
    %v357 = vmul.f32 1.0, %v356
    %v358 = vrcp.pop %v324
    %v359 = vmul.f32 %v324, %v358
    %v360 = vsub.f32 1.0, %v359
    %v361 = vmul.f32 %v358, %v360
    %v362 = vadd.f32 %v358, %v361
    %vm363 = vweird.f32 %v324
    %vm364 = vweird.f32 %v358
    %vm365 = vmor %vm363, %vm364
    %v366 = vsel %vm365, %v358, %v362
    %v367 = vand.u32 2147483647, %v324
    %vm368 = vcmp.eq.f32.partialorder %v367, 8.507059e+37
    %v369 = vand.u32 %v324, 2147483648
    %v370 = vor.u32 1.1754944e-38, %v369
    %v371 = vsel %vm368, %v370, %v366
    %v372 = vmul.f32 1.0, %v371
    %v373 = vrcp.pop %v325
    %v374 = vmul.f32 %v325, %v373
    %v375 = vsub.f32 1.0, %v374
    %v376 = vmul.f32 %v373, %v375
    %v377 = vadd.f32 %v373, %v376
    %vm378 = vweird.f32 %v325
    %vm379 = vweird.f32 %v373
    %vm380 = vmor %vm378, %vm379
    %v381 = vsel %vm380, %v373, %v377
    %v382 = vand.u32 2147483647, %v325
    %vm383 = vcmp.eq.f32.partialorder %v382, 8.507059e+37
    %v384 = vand.u32 %v325, 2147483648
    %v385 = vor.u32 1.1754944e-38, %v384
    %v386 = vsel %vm383, %v385, %v381
    %v387 = vmul.f32 1.0, %v386
    %v388 = vrcp.pop %v326
    %v389 = vmul.f32 %v326, %v388
    %v390 = vsub.f32 1.0, %v389
    %v391 = vmul.f32 %v388, %v390
    %v392 = vadd.f32 %v388, %v391
    %vm393 = vweird.f32 %v326
    %vm394 = vweird.f32 %v388
    %vm395 = vmor %vm393, %vm394
    %v396 = vsel %vm395, %v388, %v392
    %v397 = vand.u32 2147483647, %v326
    %vm398 = vcmp.eq.f32.partialorder %v397, 8.507059e+37
    %v399 = vand.u32 %v326, 2147483648
    %v400 = vor.u32 1.1754944e-38, %v399
    %v401 = vsel %vm398, %v400, %v396
    %v402 = vmul.f32 1.0, %v401
    %v403 = vrcp.pop %v327
    %v404 = vmul.f32 %v327, %v403
    %v405 = vsub.f32 1.0, %v404
    %v406 = vmul.f32 %v403, %v405
    %v407 = vadd.f32 %v403, %v406
    %vm408 = vweird.f32 %v327
    %vm409 = vweird.f32 %v403
    %vm410 = vmor %vm408, %vm409
    %v411 = vsel %vm410, %v403, %v407
    %v412 = vand.u32 2147483647, %v327
    %vm413 = vcmp.eq.f32.partialorder %v412, 8.507059e+37
    %v414 = vand.u32 %v327, 2147483648
    %v415 = vor.u32 1.1754944e-38, %v414
    %v416 = vsel %vm413, %v415, %v411
    %v417 = vmul.f32 1.0, %v416
    %v418 = vmul.f32 %v184, %v342
    %v419 = vmul.f32 %v207, %v357
    %v420 = vmul.f32 %v230, %v372
    %v421 = vmul.f32 %v187, %v387
    %v422 = vmul.f32 %v210, %v402
    %v423 = vmul.f32 %v233, %v417
    %v424 = vmul.f32 %v418, %v253
    %v425 = vmul.f32 %v419, %v276
    %v426 = vmul.f32 %v420, %v299
    %v427 = vmul.f32 %v421, %v256
    %v428 = vmul.f32 %v422, %v279
    %v429 = vmul.f32 %v423, %v302
    %v430 = vld [vmem:[#allocation2] sm:$0xff]
    %v431 = vld [vmem:[#allocation2 + $0x8] sm:$0xff]
    %v432 = vld [vmem:[#allocation8] sm:$0xff]
    %v433 = vld [vmem:[#allocation8 + $0x8] sm:$0xff]
    %v434 = vld [vmem:[#allocation8 + $0x10] sm:$0xff]
    %v435 = vld [vmem:[#allocation8 + $0x18] sm:$0xff]
    %v436 = vld [vmem:[#allocation8 + $0x20] sm:$0xff]
    %v437 = vld [vmem:[#allocation8 + $0x28] sm:$0xff]
    %v438 = vld [vmem:[#allocation8 + $0x30] sm:$0xff]
    %v439 = vld [vmem:[#allocation8 + $0x38] sm:$0xff]
    %v440 = vld [vmem:[#allocation8 + $0x40] sm:$0xff]
    %v441 = vld [vmem:[#allocation8 + $0x48] sm:$0xff]
    %v442 = vld [vmem:[#allocation8 + $0x50] sm:$0xff]
    %v443 = vld [vmem:[#allocation8 + $0x58] sm:$0xff]
    %v444 = vld [vmem:[#allocation8 + $0x60] sm:$0xff]
    %v445 = vld [vmem:[#allocation8 + $0x68] sm:$0xff]
    %v446 = vld [vmem:[#allocation8 + $0x70] sm:$0xff]
    %v447 = vld [vmem:[#allocation8 + $0x78] sm:$0xff]
    %v448 = vld [vmem:[#allocation8 + $0x80] sm:$0xff]
    %v449 = vld [vmem:[#allocation8 + $0x88] sm:$0xff]
    %v450 = vld [vmem:[#allocation8 + $0x90] sm:$0xff]
    %v451 = vld [vmem:[#allocation8 + $0x98] sm:$0xff]
    %v452 = vld [vmem:[#allocation8 + $0xa0] sm:$0xff]
    %v453 = vld [vmem:[#allocation8 + $0xa8] sm:$0xff]
    %v454 = vld [vmem:[#allocation8 + $0xb0] sm:$0xff]
    %v455 = vld [vmem:[#allocation8 + $0xb8] sm:$0xff]
    %v456 = vld [vmem:[#allocation8 + $0xc0] sm:$0xff]
    %v457 = vld [vmem:[#allocation8 + $0xc8] sm:$0xff]
    %v458 = vld [vmem:[#allocation8 + $0xd0] sm:$0xff]
    %v459 = vld [vmem:[#allocation8 + $0xd8] sm:$0xff]
    %v460 = vld [vmem:[#allocation8 + $0xe0] sm:$0xff]
    %v461 = vld [vmem:[#allocation8 + $0xe8] sm:$0xff]
    %v462 = vld [vmem:[#allocation8 + $0xf0] sm:$0xff]
    %v463 = vld [vmem:[#allocation8 + $0xf8] sm:$0xff]
    %v464 = vld [vmem:[#allocation8 + $0x100] sm:$0xff]
    %v465 = vld [vmem:[#allocation8 + $0x108] sm:$0xff]
    %v466 = vld [vmem:[#allocation8 + $0x110] sm:$0xff]
    %v467 = vld [vmem:[#allocation8 + $0x118] sm:$0xff]
    %v468 = vld [vmem:[#allocation8 + $0x120] sm:$0xff]
    %v469 = vld [vmem:[#allocation8 + $0x128] sm:$0xff]
    %v470 = vld [vmem:[#allocation8 + $0x130] sm:$0xff]
    %v471 = vld [vmem:[#allocation8 + $0x138] sm:$0xff]
    %v472 = vld [vmem:[#allocation8 + $0x140] sm:$0xff]
    %v473 = vld [vmem:[#allocation8 + $0x148] sm:$0xff]
    %v474 = vld [vmem:[#allocation8 + $0x150] sm:$0xff]
    %v475 = vld [vmem:[#allocation8 + $0x158] sm:$0xff]
    %v476 = vld [vmem:[#allocation8 + $0x160] sm:$0xff]
    %v477 = vld [vmem:[#allocation8 + $0x168] sm:$0xff]
    %v478 = vld [vmem:[#allocation8 + $0x170] sm:$0xff]
    %v479 = vld [vmem:[#allocation8 + $0x178] sm:$0xff]
    %480 = vmatpush.msra.mxu0 %v447
    %481 = vmatpush.msra.mxu0 %v446
    %482 = vmatpush.msra.mxu0 %v445
    %483 = vmatpush.msra.mxu0 %v444
    %484 = vmatpush.msra.mxu0 %v443
    %485 = vmatpush.msra.mxu0 %v442
    %486 = vmatpush.msra.mxu0 %v441
    %487 = vmatpush.msra.mxu0 %v440
    %488 = vmatpush.msra.mxu0 %v439
    %489 = vmatpush.msra.mxu0 %v438
    %490 = vmatpush.msra.mxu0 %v437
    %491 = vmatpush.msra.mxu0 %v436
    %492 = vmatpush.msra.mxu0 %v435
    %493 = vmatpush.msra.mxu0 %v434
    %494 = vmatpush.msra.mxu0 %v433
    %495 = vmatpush.msra.mxu0 %v432
    %496 = vmatmul.f32.gmra.mxu0 %v424
    %v497 = vpop.f32.mrf.mxu0
    %v498 = vadd.f32 0.0, %v497
    %499 = vmatmul.f32.gmra.mxu0 %v427
    %v500 = vpop.f32.mrf.mxu0
    %v501 = vadd.f32 0.0, %v500
    %502 = vdwg.mxu0
    %503 = vmatpush.msra.mxu0 %v463
    %504 = vmatpush.msra.mxu0 %v462
    %505 = vmatpush.msra.mxu0 %v461
    %506 = vmatpush.msra.mxu0 %v460
    %507 = vmatpush.msra.mxu0 %v459
    %508 = vmatpush.msra.mxu0 %v458
    %509 = vmatpush.msra.mxu0 %v457
    %510 = vmatpush.msra.mxu0 %v456
    %511 = vmatpush.msra.mxu0 %v455
    %512 = vmatpush.msra.mxu0 %v454
    %513 = vmatpush.msra.mxu0 %v453
    %514 = vmatpush.msra.mxu0 %v452
    %515 = vmatpush.msra.mxu0 %v451
    %516 = vmatpush.msra.mxu0 %v450
    %517 = vmatpush.msra.mxu0 %v449
    %518 = vmatpush.msra.mxu0 %v448
    %519 = vmatmul.f32.gmra.mxu0 %v425
    %v520 = vpop.f32.mrf.mxu0
    %v521 = vadd.f32 %v498, %v520
    %522 = vmatmul.f32.gmra.mxu0 %v428
    %v523 = vpop.f32.mrf.mxu0
    %v524 = vadd.f32 %v501, %v523
    %525 = vdwg.mxu0
    %526 = vmatpush.msra.mxu0 %v479
    %527 = vmatpush.msra.mxu0 %v478
    %528 = vmatpush.msra.mxu0 %v477
    %529 = vmatpush.msra.mxu0 %v476
    %530 = vmatpush.msra.mxu0 %v475
    %531 = vmatpush.msra.mxu0 %v474
    %532 = vmatpush.msra.mxu0 %v473
    %533 = vmatpush.msra.mxu0 %v472
    %534 = vmatpush.msra.mxu0 %v471
    %535 = vmatpush.msra.mxu0 %v470
    %536 = vmatpush.msra.mxu0 %v469
    %537 = vmatpush.msra.mxu0 %v468
    %538 = vmatpush.msra.mxu0 %v467
    %539 = vmatpush.msra.mxu0 %v466
    %540 = vmatpush.msra.mxu0 %v465
    %541 = vmatpush.msra.mxu0 %v464
    %542 = vmatmul.f32.gmra.mxu0 %v426
    %v543 = vpop.f32.mrf.mxu0
    %v544 = vadd.f32 %v521, %v543
    %545 = vmatmul.f32.gmra.mxu0 %v429
    %v546 = vpop.f32.mrf.mxu0
    %v547 = vadd.f32 %v524, %v546
    %548 = vdwg.mxu0
    %v549 = vadd.f32 %v430, %v544
    %v550 = vadd.f32 %v431, %v547
    %551 = vst [vmem:[#allocation2] sm:$0xff] %v549
    %552 = vst [vmem:[#allocation2 + $0x8] sm:$0xff] %v550
    // Predicated region
    $region30: #{tpu_custom_call.1} parent=1 // pred_check
      %p553 = pneg %p62
    $region31: #{tpu_custom_call.1} parent=1 // pred_check_branch
      %555 = sbr.rel (%p553) target = $region33
    $region32: #{tpu_custom_call.1} parent=1 // pred_region
      %v556 = vld [vmem:[#allocation2] sm:$0xff]
      %v557 = vld [vmem:[#allocation2 + $0x8] sm:$0xff]
      %558 = vst [vmem:[#allocation9] sm:$0xff] %v556
      %559 = vst [vmem:[#allocation9 + $0x8] sm:$0xff] %v557
    $region33: #{tpu_custom_call.1} parent=1 // pred_fallthru
      _
    // Predicated region
    $region34: #{tpu_custom_call.1} parent=1 // pred_check
      _
    $region35: #{tpu_custom_call.1} parent=1 // pred_check_branch
      %561 = sbr.rel (0) target = $region37
    $region36: #{tpu_custom_call.1} parent=1 // pred_region
      %563 = vsyncadd [#allocation5], 0
      %s564 = sshll.u32 [#allocation9], 4
      %s565 = int_to_ptr.vmem [resolvable:$true] %s564
      %s566 = sshll.u32 %s3, 4
      %s567 = int_to_ptr.hbm [resolvable:$true] %s566
      %572 = dma.vmem_to_hbm [thread:$0]  %s565, 256, %s567, [#allocation5], 128, 128, 8
    $region37: #{tpu_custom_call.1} parent=1 // pred_fallthru
      _
    // Predicated region
    $region38: #{tpu_custom_call.1} parent=1 // pred_check
      _
    $region39: #{tpu_custom_call.1} parent=1 // pred_check_branch
      %574 = sbr.rel (0) target = $region41
    $region40: #{tpu_custom_call.1} parent=1 // pred_region
      %576 = dma.done [#allocation5], 256
    $region41: #{tpu_custom_call.1} parent=1 // pred_fallthru
      _
    %577 = vsyncpa [#allocation4], 1
    %578 = vsyncpa [#allocation7], 1
    %579 = vsyncpa [#allocation5], 1

</llo_original>
